<compile_context>
chip_gen: v7x
topology: tpu7x:2x2x1
jax: 0.10.0
libtpu: 0.0.40
codegen_flags: <defaults>
</compile_context>

<pallas_src>
import functools
from math import log

import jax
import jax.numpy as jnp
from jax.experimental import pallas as pl
from jax.experimental.pallas import tpu as pltpu


# ----------------------------------------------------------------------------
# Parameter construction (mirrors TAM.__init__ structure; deterministic init).
# Grouped convs keep their true [cout, cin_per_group] weight shape.
# ----------------------------------------------------------------------------
def make_tam_params(key, n_ch, group_size):
    layers = []
    c = n_ch
    keys = iter(jax.random.split(key, 64))
    for _ in range(int(log(n_ch) / log(group_size))):
        groups = c // group_size          # == cout (1 out channel per group)
        cout = c // group_size
        cin_pg = c // groups              # == group_size
        w = jax.random.normal(next(keys), (cout, cin_pg), jnp.float32) * 0.5
        b = jax.random.normal(next(keys), (cout,), jnp.float32) * 0.1
        layer = dict(w=w, b=b, groups=groups, cin=c)
        c = cout
        if c == 1:
            layer["prelu"] = None
            layers.append(layer)
            break
        # nn.PReLU(c, init=0.0) -> per-channel slope initialized to 0.0
        layer["prelu"] = jnp.zeros((c,), jnp.float32)
        layers.append(layer)
    if c != 1:
        w = jax.random.normal(next(keys), (1, c), jnp.float32) * 0.5
        b = jax.random.normal(next(keys), (1,), jnp.float32) * 0.1
        layers.append(dict(w=w, b=b, groups=1, cin=c, prelu=None))
    return layers


# ----------------------------------------------------------------------------
# Static "plan" (group connectivity + SMEM offsets) and flat parameter vector
# ----------------------------------------------------------------------------
def _build_plan_and_params(layers):
    flat = []
    off = 0

    def push(arr):
        nonlocal off
        a = jnp.asarray(arr, jnp.float32).reshape(-1)
        flat.append(a)
        start = off
        off += int(a.shape[0])
        return start

    plan = []
    for l in layers:
        cout, cin_pg = l["w"].shape
        groups = l["groups"]
        cout_pg = cout // groups
        w_off = push(l["w"])                       # row-major [cout, cin_pg]
        b_off = push(l["b"])
        p_off = push(l["prelu"]) if l["prelu"] is not None else None
        conns = []
        for j in range(cout):
            g = j // cout_pg
            in_idx = tuple(range(g * cin_pg, (g + 1) * cin_pg))
            w_offs = tuple(w_off + j * cin_pg + i for i in range(cin_pg))
            conns.append((in_idx, w_offs, b_off + j,
                          (p_off + j) if p_off is not None else None))
        plan.append(tuple(conns))
    params = jnp.concatenate(flat)
    return tuple(plan), params


# ----------------------------------------------------------------------------
# Pallas kernel: whole attention branch + final multiply on a [C, TS] tile.
# Params live in SMEM; channel mixing is unrolled VPU broadcast-mul-adds.
# ----------------------------------------------------------------------------
def _tam_kernel(plan, p_ref, x_ref, o_ref):
    x = x_ref[0]                              # [C, TS] native dtype
    xf = x.astype(jnp.float32)                # compute in f32 (safe on v5e too)
    C = xf.shape[0]
    rows = [xf[i:i + 1, :] for i in range(C)]  # per-channel [1, TS] rows

    for conns in plan:                        # static unroll over layers
        new_rows = []
        for (in_idx, w_offs, b_off, a_off) in conns:   # static unroll / channel
            acc = rows[in_idx[0]] * p_ref[w_offs[0]]
            for i, wo in zip(in_idx[1:], w_offs[1:]):
                acc = acc + rows[i] * p_ref[wo]
            acc = acc + p_ref[b_off]
            if a_off is not None:             # per-channel PReLU
                acc = jnp.maximum(acc, 0.0) + p_ref[a_off] * jnp.minimum(acc, 0.0)
            new_rows.append(acc)
        rows = new_rows

    att = jax.nn.sigmoid(rows[0])             # [1, TS]
    o_ref[0] = (xf * att).astype(o_ref.dtype)  # broadcast over channels once


# ----------------------------------------------------------------------------
# Tile-size selection: biggest lane-dense divisor of HW within a VMEM budget
# ----------------------------------------------------------------------------
def _pick_ts(hw, c, itemsize, budget_bytes=2 << 20):
    if hw % 128 != 0:
        # fall back to a full-row block (uses the "full array dim" exception)
        return hw
    max_ts = max(128, (budget_bytes // max(1, c * itemsize)) // 128 * 128)
    best = 128
    k = hw // 128
    for d in range(1, k + 1):
        if k % d == 0 and 128 * d <= max_ts:
            best = 128 * d
    return best


def tam_forward(x_nchw, layers, *, ts=None):
    B, C, H, W = x_nchw.shape
    HW = H * W
    x = x_nchw.reshape(B, C, HW)              # native dtype, no extra cast pass

    if ts is None:
        ts = _pick_ts(HW, C, x.dtype.itemsize)
    assert HW % ts == 0

    plan, params = _build_plan_and_params(layers)
    kernel = functools.partial(_tam_kernel, plan)

    out = pl.pallas_call(
        kernel,
        out_shape=jax.ShapeDtypeStruct((B, C, HW), x.dtype),
        grid=(B, HW // ts),
        in_specs=[
            pl.BlockSpec(memory_space=pltpu.MemorySpace.SMEM),     # params
            pl.BlockSpec((1, C, ts), lambda b, s: (b, 0, s)),      # x tile
        ],
        out_specs=pl.BlockSpec((1, C, ts), lambda b, s: (b, 0, s)),
        compiler_params=pltpu.CompilerParams(
            dimension_semantics=("parallel", "parallel")),
    )(params, x)
    return out.reshape(B, C, H, W)


# ----------------------------------------------------------------------------
# Pure-JAX reference (for correctness check only)
# ----------------------------------------------------------------------------
def tam_ref(x_nchw, layers):
    B, C, H, W = x_nchw.shape
    x = x_nchw.reshape(B, C, H * W).astype(jnp.float32)
    h = x
    for l in layers:
        cout, cin_pg = l["w"].shape
        groups = l["groups"]
        cout_pg = cout // groups
        hg = h.reshape(B, groups, cin_pg, -1)
        wg = l["w"].reshape(groups, cout_pg, cin_pg)
        h = jnp.einsum("goc,bgcs->bgos", wg, hg).reshape(B, cout, -1)
        h = h + l["b"][None, :, None]
        if l["prelu"] is not None:
            a = l["prelu"][None, :, None]
            h = jnp.maximum(h, 0.0) + a * jnp.minimum(h, 0.0)
    att = jax.nn.sigmoid(h)
    return (x * att).reshape(B, C, H, W).astype(x_nchw.dtype)


if __name__ == "__main__":
    key = jax.random.PRNGKey(0)
    k_x, k_p = jax.random.split(key)

    n_ch, group_size = 4, 2
    B, H, W = 2, 16, 16
    x = jax.random.normal(k_x, (B, n_ch, H, W), jnp.float32)

    layers = make_tam_params(k_p, n_ch, group_size)

    out = tam_forward(x, layers)
    out = jax.block_until_ready(out)

    ref = tam_ref(x, layers)
    assert out.shape == x.shape
    assert jnp.allclose(out, ref, atol=1e-5, rtol=1e-5)

    print("KERNEL_OK")
</pallas_src>

<mosaic_0001>
module attributes {stable_mosaic.version = 11 : i64} {
  func.func @_tam_kernel(%arg0: i32, %arg1: i32, %arg2: memref<11xf32, #tpu.memory_space<smem>>, %arg3: memref<1x4x256xf32, #tpu.memory_space<vmem>>, %arg4: memref<1x4x256xf32, #tpu.memory_space<vmem>>) attributes {dimension_semantics = [#tpu.dimension_semantics<parallel>, #tpu.dimension_semantics<parallel>], iteration_bounds = array<i64: 2, 1>, scalar_prefetch = 0 : i64, scratch_operands = 0 : i64, tpu.core_type = #tpu.core_type<tc>, window_params = [{transform_indices = @transform_0, window_bounds = array<i64: 11>}, {transform_indices = @transform_1, window_bounds = array<i64: 1, 4, 256>}, {transform_indices = @transform_2, window_bounds = array<i64: 1, 4, 256>}]} {
    %c0 = arith.constant 0 : index
    %c0_0 = arith.constant 0 : index
    %c0_1 = arith.constant 0 : index
    %0 = vector.load %arg3[%c0, %c0_0, %c0_1] : memref<1x4x256xf32, #tpu.memory_space<vmem>>, vector<1x4x256xf32>
    %1 = vector.shape_cast %0 : vector<1x4x256xf32> to vector<4x256xf32>
    %2 = vector.extract_strided_slice %1 {offsets = [0, 0], sizes = [1, 256], strides = [1, 1]} : vector<4x256xf32> to vector<1x256xf32>
    %3 = vector.extract_strided_slice %1 {offsets = [1, 0], sizes = [1, 256], strides = [1, 1]} : vector<4x256xf32> to vector<1x256xf32>
    %4 = vector.extract_strided_slice %1 {offsets = [2, 0], sizes = [1, 256], strides = [1, 1]} : vector<4x256xf32> to vector<1x256xf32>
    %5 = vector.extract_strided_slice %1 {offsets = [3, 0], sizes = [1, 256], strides = [1, 1]} : vector<4x256xf32> to vector<1x256xf32>
    %c0_2 = arith.constant 0 : index
    %6 = memref.load %arg2[%c0_2] : memref<11xf32, #tpu.memory_space<smem>>
    %7 = vector.broadcast %6 : f32 to vector<1x256xf32>
    %8 = arith.mulf %2, %7 : vector<1x256xf32>
    %c1 = arith.constant 1 : index
    %9 = memref.load %arg2[%c1] : memref<11xf32, #tpu.memory_space<smem>>
    %10 = vector.broadcast %9 : f32 to vector<1x256xf32>
    %11 = arith.mulf %3, %10 : vector<1x256xf32>
    %12 = arith.addf %8, %11 : vector<1x256xf32>
    %c4 = arith.constant 4 : index
    %13 = memref.load %arg2[%c4] : memref<11xf32, #tpu.memory_space<smem>>
    %14 = vector.broadcast %13 : f32 to vector<1x256xf32>
    %15 = arith.addf %12, %14 : vector<1x256xf32>
    %cst = arith.constant 0.000000e+00 : f32
    %16 = vector.broadcast %cst : f32 to vector<1x256xf32>
    %17 = arith.maximumf %15, %16 : vector<1x256xf32>
    %c6 = arith.constant 6 : index
    %18 = memref.load %arg2[%c6] : memref<11xf32, #tpu.memory_space<smem>>
    %cst_3 = arith.constant 0.000000e+00 : f32
    %19 = vector.broadcast %cst_3 : f32 to vector<1x256xf32>
    %20 = arith.minimumf %15, %19 : vector<1x256xf32>
    %21 = vector.broadcast %18 : f32 to vector<1x256xf32>
    %22 = arith.mulf %21, %20 : vector<1x256xf32>
    %23 = arith.addf %17, %22 : vector<1x256xf32>
    %c2 = arith.constant 2 : index
    %24 = memref.load %arg2[%c2] : memref<11xf32, #tpu.memory_space<smem>>
    %25 = vector.broadcast %24 : f32 to vector<1x256xf32>
    %26 = arith.mulf %4, %25 : vector<1x256xf32>
    %c3 = arith.constant 3 : index
    %27 = memref.load %arg2[%c3] : memref<11xf32, #tpu.memory_space<smem>>
    %28 = vector.broadcast %27 : f32 to vector<1x256xf32>
    %29 = arith.mulf %5, %28 : vector<1x256xf32>
    %30 = arith.addf %26, %29 : vector<1x256xf32>
    %c5 = arith.constant 5 : index
    %31 = memref.load %arg2[%c5] : memref<11xf32, #tpu.memory_space<smem>>
    %32 = vector.broadcast %31 : f32 to vector<1x256xf32>
    %33 = arith.addf %30, %32 : vector<1x256xf32>
    %cst_4 = arith.constant 0.000000e+00 : f32
    %34 = vector.broadcast %cst_4 : f32 to vector<1x256xf32>
    %35 = arith.maximumf %33, %34 : vector<1x256xf32>
    %c7 = arith.constant 7 : index
    %36 = memref.load %arg2[%c7] : memref<11xf32, #tpu.memory_space<smem>>
    %cst_5 = arith.constant 0.000000e+00 : f32
    %37 = vector.broadcast %cst_5 : f32 to vector<1x256xf32>
    %38 = arith.minimumf %33, %37 : vector<1x256xf32>
    %39 = vector.broadcast %36 : f32 to vector<1x256xf32>
    %40 = arith.mulf %39, %38 : vector<1x256xf32>
    %41 = arith.addf %35, %40 : vector<1x256xf32>
    %c8 = arith.constant 8 : index
    %42 = memref.load %arg2[%c8] : memref<11xf32, #tpu.memory_space<smem>>
    %43 = vector.broadcast %42 : f32 to vector<1x256xf32>
    %44 = arith.mulf %23, %43 : vector<1x256xf32>
    %c9 = arith.constant 9 : index
    %45 = memref.load %arg2[%c9] : memref<11xf32, #tpu.memory_space<smem>>
    %46 = vector.broadcast %45 : f32 to vector<1x256xf32>
    %47 = arith.mulf %41, %46 : vector<1x256xf32>
    %48 = arith.addf %44, %47 : vector<1x256xf32>
    %c10 = arith.constant 10 : index
    %49 = memref.load %arg2[%c10] : memref<11xf32, #tpu.memory_space<smem>>
    %50 = vector.broadcast %49 : f32 to vector<1x256xf32>
    %51 = arith.addf %48, %50 : vector<1x256xf32>
    %52 = arith.negf %51 : vector<1x256xf32>
    %53 = math.exp %52 : vector<1x256xf32>
    %cst_6 = arith.constant 1.000000e+00 : f32
    %54 = vector.broadcast %cst_6 : f32 to vector<1x256xf32>
    %55 = arith.addf %54, %53 : vector<1x256xf32>
    %56 = arith.divf %54, %55 : vector<1x256xf32>
    %57 = vector.broadcast %56 : vector<1x256xf32> to vector<4x256xf32>
    %58 = arith.mulf %1, %57 : vector<4x256xf32>
    %c0_7 = arith.constant 0 : index
    %c0_8 = arith.constant 0 : index
    %c0_9 = arith.constant 0 : index
    %59 = vector.load %arg4[%c0_7, %c0_8, %c0_9] : memref<1x4x256xf32, #tpu.memory_space<vmem>>, vector<1x4x256xf32>
    %60 = vector.shape_cast %59 : vector<1x4x256xf32> to vector<4x256xf32>
    %61 = vector.shape_cast %58 : vector<4x256xf32> to vector<1x4x256xf32>
    tpu.vector_store %arg4[%c0_7, %c0_8, %c0_9], %61 {strides = array<i32>} : memref<1x4x256xf32, #tpu.memory_space<vmem>>, vector<1x4x256xf32>,
    return
  }
  func.func @transform_0(%arg0: i32, %arg1: i32) -> i32 {
    %c0_i32 = arith.constant 0 : i32
    %c0_i32_0 = arith.constant 0 : i32
    return %c0_i32 : i32
  }
  func.func @transform_1(%arg0: i32, %arg1: i32) -> (i32, i32, i32) {
    %c0_i32 = arith.constant 0 : i32
    %c0_i32_0 = arith.constant 0 : i32
    return %arg0, %c0_i32, %arg1 : i32, i32, i32
  }
  func.func @transform_2(%arg0: i32, %arg1: i32) -> (i32, i32, i32) {
    %c0_i32 = arith.constant 0 : i32
    %c0_i32_0 = arith.constant 0 : i32
    return %arg0, %c0_i32, %arg1 : i32, i32, i32
  }
}

</mosaic_0001>

<llo_original>
// kernel: tpu_custom_call.1
$region0: #{tpu_custom_call.1}
  #allocation0 [shape = 'u32[]', space=smem, size = 0x4, offset = 0x4, fixed_abs, tag = 'smem constant byte address 0x4 - core index']
  #allocation1 [shape = 'u32[144,128]{1,0:T(1,128)}', space=vmem, size = 0x12000, scoped, tag = 'internal scratch']
  %s0 = inlined_call_operand.hbm [shape: f32[11], index: 0, kind: input, shape index: {}]
  %s1 = inlined_call_operand.hbm [shape: f32[2,4,256], index: 1, kind: input, shape index: {}]
  %s2 = inlined_call_operand.hbm [shape: f32[2,4,256], index: 2, kind: output, shape index: {}]
  %s3 = sld [smem:[#allocation0]]
  $region49: #{tpu_custom_call.1} parent=0
    _
  %s5 = ssub.s32 1, %s3
  %s6 = scalar_select 0, %s5, %s3
  $region1: #{tpu_custom_call.1} parent=0
    #allocation2 [shape = 'u8[512]{0}', space=smem, size = 0x200, scoped, tag = 'input window, operand 0, single buffered']
    #allocation3 [shape = 's32[2]{0}', space=sflag, size = 0x8, scoped, tag = 'scoped memory for tpu_custom_call.1']
    #allocation4 [shape = 's32[2]{0}', space=sflag, size = 0x8, scoped, tag = 'scoped memory for tpu_custom_call.1']
    #allocation5 [shape = 's32[2]{0}', space=sflag, size = 0x8, scoped, tag = 'scoped memory for tpu_custom_call.1']
    #allocation6 [shape = 'u8[8192]{0}', space=vmem, size = 0x2000, scoped, tag = 'input window, operand 1']
    #allocation7 [shape = 'u8[8192]{0}', space=vmem, size = 0x2000, scoped, tag = 'output window, operand 0']
    %7 = vsyncpa [#allocation5], 0
    %8 = vsyncpa [#allocation3], 0
    %s9 = scalar_lea.sflag [#allocation3], 1
    %10 = vsyncpa %s9, 0
    %11 = vsyncpa [#allocation4], 0
    %s12 = scalar_lea.sflag [#allocation4], 1
    %13 = vsyncpa %s12, 0
    loop: start=0, step=1, limit=4
    $region2: #{tpu_custom_call.1} parent=1 // loop_pre_header
      _
    $region3: #{tpu_custom_call.1} parent=1 // loop_header
      %s15 = sphi 0, %s19
      %p16 = scmp.ge.s32.totalorder %s15, 4
      %s22 = sphi 0, %s34
      %s23 = sphi 0, %s30
      %s24 = sphi 0, %s22
      %s25 = sphi 0, %s23
      %s26 = sphi 0, %s24
      %s27 = sphi 0, %s25
      %s35 = sphi 0, %s35
      %s37 = sphi 0, %s35
      %s38 = sphi 0, %s37
      %s52 = sphi 0, %s38
      %s60 = sphi 0, %s62
      %s63 = sphi 0, %s60
      %s64 = sphi 0, %s63
      %s80 = sphi 0, %s64
      %s88 = sphi 0, %s90
      %s91 = sphi 0, %s88
      %s92 = sphi 0, %s91
      %s108 = sphi 0, %s92
    $region4: #{tpu_custom_call.1} parent=1 // loop_header_branch
      %18 = sbr.rel (%p16) target = $region8
    $region5: #{tpu_custom_call.1} parent=1 // loop_body
      %s20 = ssub.s32 %s15, 1
      %s21 = ssub.s32 %s15, 2
      %s28 = sadd.s32 1, %s23
      %p29 = scmp.ge.s32.totalorder %s28, 1
      %s30 = scalar_select %p29, 0, %s28
      %s31 = sadd.s32 1, %s22
      %s32 = scalar_select %p29, %s31, %s22
      %p33 = scmp.ge.s32.totalorder %s32, 2
      %s34 = scalar_select %p33, 0, %s32
      %s36 = sadd.s32 %s35, 1
      %p39 = scmp.eq.s32.totalorder %s15, 1
      %p40 = scmp.ne.s32.totalorder %s35, %s37
      %p41 = scmp.eq.s32.totalorder %s15, 0
      %p42 = por %p40, %p41
      %p43 = scmp.ne.s32.totalorder %s35, %s37
      %p44 = scmp.eq.s32.totalorder %s20, 1
      %p45 = por %p43, %p44
      %p46 = scmp.ne.s32.totalorder %s37, %s38
      %p47 = scmp.eq.s32.totalorder %s20, 0
      %p48 = por %p46, %p47
      %p49 = scmp.ne.s32.totalorder %s37, %s38
      %p50 = scmp.eq.s32.totalorder %s21, 1
      %p51 = por %p49, %p50
      %p53 = scmp.ne.s32.totalorder %s38, %s52
      %p54 = scmp.eq.s32.totalorder %s21, 0
      %p55 = por %p53, %p54
      %s56 = ssub.s32 %s22, %s34
      %s57 = ssub.s32 %s23, %s30
      %s58 = sor.u32 %s56, %s57
      %p59 = scmp.eq.s32.totalorder %s58, 0
      %s61 = sadd.s32 %s60, 1
      %s62 = scalar_select %p59, %s60, %s61
      %p65 = pneg %p59
      %p66 = scmp.eq.s32.totalorder %s15, 1
      %p67 = por %p65, %p66
      %p68 = scmp.ne.s32.totalorder %s60, %s63
      %p69 = scmp.eq.s32.totalorder %s15, 0
      %p70 = por %p68, %p69
      %p71 = scmp.ne.s32.totalorder %s60, %s63
      %p72 = scmp.eq.s32.totalorder %s20, 1
      %p73 = por %p71, %p72
      %p74 = scmp.ne.s32.totalorder %s63, %s64
      %p75 = scmp.eq.s32.totalorder %s20, 0
      %p76 = por %p74, %p75
      %p77 = scmp.ne.s32.totalorder %s63, %s64
      %p78 = scmp.eq.s32.totalorder %s21, 1
      %p79 = por %p77, %p78
      %p81 = scmp.ne.s32.totalorder %s64, %s80
      %p82 = scmp.eq.s32.totalorder %s21, 0
      %p83 = por %p81, %p82
      %s84 = ssub.s32 %s22, %s34
      %s85 = ssub.s32 %s23, %s30
      %s86 = sor.u32 %s84, %s85
      %p87 = scmp.eq.s32.totalorder %s86, 0
      %s89 = sadd.s32 %s88, 1
      %s90 = scalar_select %p87, %s88, %s89
      %p93 = pneg %p87
      %p94 = scmp.eq.s32.totalorder %s15, 1
      %p95 = por %p93, %p94
      %p96 = scmp.ne.s32.totalorder %s88, %s91
      %p97 = scmp.eq.s32.totalorder %s15, 0
      %p98 = por %p96, %p97
      %p99 = scmp.ne.s32.totalorder %s88, %s91
      %p100 = scmp.eq.s32.totalorder %s20, 1
      %p101 = por %p99, %p100
      %p102 = scmp.ne.s32.totalorder %s91, %s92
      %p103 = scmp.eq.s32.totalorder %s20, 0
      %p104 = por %p102, %p103
      %p105 = scmp.ne.s32.totalorder %s91, %s92
      %p106 = scmp.eq.s32.totalorder %s21, 1
      %p107 = por %p105, %p106
      %p109 = scmp.ne.s32.totalorder %s92, %s108
      %p110 = scmp.eq.s32.totalorder %s21, 0
      %p111 = por %p109, %p110
      %p112 = scmp.le.s32.totalorder 1, %s15
      %p113 = scmp.lt.s32.totalorder %s15, 3
      %p114 = pnand %p112, %p113
      %p115 = pneg %p114
      // Predicated region
      $region9: #{tpu_custom_call.1} parent=5 // pred_check
        _
      $region10: #{tpu_custom_call.1} parent=5 // pred_check_branch
        %117 = sbr.rel (%p114) target = $region12
      $region11: #{tpu_custom_call.1} parent=5 // pred_region
        %s118 = ssub.s32 %s15, 1
        // Predicated region
        $region13: #{tpu_custom_call.1} parent=11 // pred_check
          %p119 = pneg %p48
        $region14: #{tpu_custom_call.1} parent=11 // pred_check_branch
          %121 = sbr.rel (%p119) target = $region16
        $region15: #{tpu_custom_call.1} parent=11 // pred_region
          %s123 = ssub.s32 16, 16
          %124 = vsyncadd [#allocation5], %s123
          %127 = dma.hbm_to_smem %s0, 16, [#allocation2], [#allocation5]
        $region16: #{tpu_custom_call.1} parent=11 // pred_fallthru
          _
      $region12: #{tpu_custom_call.1} parent=5 // pred_fallthru
        _
      %p128 = scmp.lt.s32.totalorder %s15, 2
      // Predicated region
      $region17: #{tpu_custom_call.1} parent=5 // pred_check
        %p129 = pneg %p128
      $region18: #{tpu_custom_call.1} parent=5 // pred_check_branch
        %131 = sbr.rel (%p129) target = $region20
      $region19: #{tpu_custom_call.1} parent=5 // pred_region
        // Predicated region
        $region21: #{tpu_custom_call.1} parent=19 // pred_check
          %p132 = pneg %p70
        $region22: #{tpu_custom_call.1} parent=19 // pred_check_branch
          %134 = sbr.rel (%p132) target = $region24
        $region23: #{tpu_custom_call.1} parent=19 // pred_region
          %s135 = sand.u32 %s60, 1
          %s136 = scalar_lea.sflag [#allocation3], %s135
          %s137 = sand.u32 %s60, 1
          %s138 = smul.addr %s137, 8
          %s139 = scalar_lea.vmem [#allocation6], %s138
          %s140 = smul.u32 2, %s23
          %s142 = ssub.s32 128, 128
          %143 = vsyncadd %s136, %s142
          %s144 = smul.addr %s22, 2
          %s145 = sadd.s32 %s140, %s144
          %s146 = smul.addr %s145, 64
          %s147 = scalar_lea.hbm %s1, %s146
          %s149 = sshll.u32 %s139, 4
          %s150 = int_to_ptr.vmem [resolvable:$true] %s149
          %152 = dma.hbm_to_vmem [thread:$0]  %s147, 128, %s150, %s136
        $region24: #{tpu_custom_call.1} parent=19 // pred_fallthru
          _
      $region20: #{tpu_custom_call.1} parent=5 // pred_fallthru
        _
      %p153 = scmp.le.s32.totalorder 1, %s15
      %p154 = scmp.lt.s32.totalorder %s15, 3
      %p155 = pnand %p153, %p154
      %p156 = pneg %p155
      // Predicated region
      $region25: #{tpu_custom_call.1} parent=5 // pred_check
        _
      $region26: #{tpu_custom_call.1} parent=5 // pred_check_branch
        %158 = sbr.rel (%p155) target = $region28
      $region27: #{tpu_custom_call.1} parent=5 // pred_region
        %s159 = ssub.s32 %s15, 1
        // Predicated region
        $region29: #{tpu_custom_call.1} parent=27 // pred_check
          %p160 = pneg %p48
        $region30: #{tpu_custom_call.1} parent=27 // pred_check_branch
          %162 = sbr.rel (%p160) target = $region32
        $region31: #{tpu_custom_call.1} parent=27 // pred_region
          %163 = dma.done [#allocation5], 16
        $region32: #{tpu_custom_call.1} parent=27 // pred_fallthru
          _
        %s164 = sand.u32 %s63, 1
        %s165 = scalar_lea.sflag [#allocation3], %s164
        %s166 = sand.u32 %s63, 1
        %s167 = smul.addr %s166, 8
        %s168 = scalar_lea.vmem [#allocation6], %s167
        // Predicated region
        $region33: #{tpu_custom_call.1} parent=27 // pred_check
          %p169 = pneg %p76
        $region34: #{tpu_custom_call.1} parent=27 // pred_check_branch
          %171 = sbr.rel (%p169) target = $region36
        $region35: #{tpu_custom_call.1} parent=27 // pred_region
          %172 = dma.done %s165, 128
        $region36: #{tpu_custom_call.1} parent=27 // pred_fallthru
          _
        %173 = sfence
        %p174 = pneg %p48
        %p175 = pneg %p45
        %s176 = sand.u32 %s63, 1
        %s177 = scalar_lea.sflag [#allocation3], %s176
        %s178 = sand.u32 %s63, 1
        %s179 = smul.addr %s178, 8
        %s180 = scalar_lea.vmem [#allocation6], %s179
        %p181 = pneg %p76
        %p182 = pneg %p73
        %p183 = pneg %p104
        %p184 = pneg %p101
        %s185 = sand.u32 %s91, 1
        %s186 = scalar_lea.sflag [#allocation4], %s185
        %s187 = sand.u32 %s91, 1
        %s188 = smul.addr %s187, 8
        %s189 = scalar_lea.vmem [#allocation7], %s188
        %s190 = smul.u32 2, %s25
        %s191 = smul.u32 2, %s25
        %v192 = vld [vmem:[%s168] sm:$0xff]
        %s193 = sld [smem:[#allocation2]]
        %v194 = vstv %s193
        %v195 = vmul.f32 %v192, %v194
        %s196 = sld [smem:[#allocation2 + $0x1]]
        %v197 = vstv %s196
        %v198 = vmul.f32 %v192, %v197
        %v200 = vrot.slane %v198, 5
        %v201 = vrot.slane %v200, 4
        %v203 = vadd.f32 %v195, %v201
        %s204 = sld [smem:[#allocation2 + $0x4]]
        %v205 = vstv %s204
        %v206 = vadd.f32 %v203, %v205
        %v207 = vmax.f32 %v206, 0.0
        %s208 = sld [smem:[#allocation2 + $0x6]]
        %v209 = vmin.f32 %v206, 0.0
        %v210 = vstv %s208
        %v211 = vmul.f32 %v210, %v209
        %v212 = vadd.f32 %v207, %v211
        %s213 = sld [smem:[#allocation2 + $0x2]]
        %v214 = vstv %s213
        %v215 = vmul.f32 %v192, %v214
        %s216 = sld [smem:[#allocation2 + $0x3]]
        %v217 = vstv %s216
        %v218 = vmul.f32 %v192, %v217
        %v220 = vrot.slane %v218, 5
        %v221 = vrot.slane %v220, 4
        %v223 = vadd.f32 %v215, %v221
        %s224 = sld [smem:[#allocation2 + $0x5]]
        %v225 = vstv %s224
        %v226 = vadd.f32 %v223, %v225
        %v227 = vmax.f32 %v226, 0.0
        %s228 = sld [smem:[#allocation2 + $0x7]]
        %v229 = vmin.f32 %v226, 0.0
        %v230 = vstv %s228
        %v231 = vmul.f32 %v230, %v229
        %v232 = vadd.f32 %v227, %v231
        %s233 = sld [smem:[#allocation2 + $0x8]]
        %v234 = vstv %s233
        %v235 = vmul.f32 %v212, %v234
        %s236 = sld [smem:[#allocation2 + $0x9]]
        %v237 = vstv %s236
        %v238 = vmul.f32 %v232, %v237
        %v240 = vrot.slane %v238, 6
        %v241 = vrot.slane %v240, 4
        %v243 = vadd.f32 %v235, %v241
        %s244 = sld [smem:[#allocation2 + $0xa]]
        %v245 = vstv %s244
        %v246 = vadd.f32 %v243, %v245
        %v247 = vxor.u32 %v246, 2147483648
        %v248 = vmul.f32 %v247, 1.442695
        %v249 = vpow.pop %v248
        %v250 = vadd.f32 %v249, 1.0
        %v251 = vrcp.pop %v250
        %v252 = vmul.f32 1.0, %v251
        %v254 = vlaneseq
        %v255 = vshrl.u32 %v254, 7
        %v256 = vsub.s32 0, %v255
        %v257 = vrot.slane %v252, %v256
        %v258 = vlaneseq
        %v259 = vshrl.u32 %v258, 7
        %v260 = vsub.s32 4, %v259
        %v261 = vrot.slane %v252, %v260
        %v264 = vlaneseq
        %v265 = vshrl.u32 %v264, 7
        %v266 = vsub.s32 0, %v265
        %v267 = vrot.slane %v257, %v266
        %v268 = vlaneseq
        %v269 = vshrl.u32 %v268, 7
        %v270 = vsub.s32 0, %v269
        %v271 = vrot.slane %v261, %v270
        %v274 = vcombine.low %v267, %v271
        %v276 = vmul.f32 %v192, %v274
        %277 = vst [vmem:[%s189] sm:$0xff] %v276
        %s278 = sand.u32 %s91, 1
        %s279 = scalar_lea.sflag [#allocation4], %s278
        %s280 = sand.u32 %s91, 1
        %s281 = smul.addr %s280, 8
        %s282 = scalar_lea.vmem [#allocation7], %s281
        // Predicated region
        $region37: #{tpu_custom_call.1} parent=27 // pred_check
          %p283 = pneg %p101
        $region38: #{tpu_custom_call.1} parent=27 // pred_check_branch
          %285 = sbr.rel (%p283) target = $region40
        $region39: #{tpu_custom_call.1} parent=27 // pred_region
          %s286 = smul.u32 2, %s25
          %s288 = ssub.s32 128, 128
          %289 = vsyncadd %s279, %s288
          %s290 = smul.addr %s24, 2
          %s291 = sadd.s32 %s286, %s290
          %s292 = smul.addr %s291, 64
          %s293 = scalar_lea.hbm %s2, %s292
          %s295 = sshll.u32 %s282, 4
          %s296 = int_to_ptr.vmem [resolvable:$true] %s295
          %298 = dma.vmem_to_hbm [thread:$0]  %s296, 128, %s293, %s279
        $region40: #{tpu_custom_call.1} parent=27 // pred_fallthru
          _
      $region28: #{tpu_custom_call.1} parent=5 // pred_fallthru
        _
      %p299 = scmp.le.s32.totalorder 2, %s15
      // Predicated region
      $region41: #{tpu_custom_call.1} parent=5 // pred_check
        %p300 = pneg %p299
      $region42: #{tpu_custom_call.1} parent=5 // pred_check_branch
        %302 = sbr.rel (%p300) target = $region44
      $region43: #{tpu_custom_call.1} parent=5 // pred_region
        %s303 = ssub.s32 %s15, 2
        // Predicated region
        $region45: #{tpu_custom_call.1} parent=43 // pred_check
          %p304 = pneg %p107
        $region46: #{tpu_custom_call.1} parent=43 // pred_check_branch
          %306 = sbr.rel (%p304) target = $region48
        $region47: #{tpu_custom_call.1} parent=43 // pred_region
          %s307 = sand.u32 %s92, 1
          %s308 = scalar_lea.sflag [#allocation4], %s307
          %s309 = sand.u32 %s92, 1
          %s310 = smul.addr %s309, 8
          %s311 = scalar_lea.vmem [#allocation7], %s310
          %312 = dma.done %s308, 128
        $region48: #{tpu_custom_call.1} parent=43 // pred_fallthru
          _
      $region44: #{tpu_custom_call.1} parent=5 // pred_fallthru
        _
    $region6: #{tpu_custom_call.1} parent=1 // loop_footer
      %s19 = sadd.s32 1, %s15
    $region7: #{tpu_custom_call.1} parent=1 // loop_footer_branch
      %14 = sbr.rel target = $region3
    $region8: #{tpu_custom_call.1} parent=1 // loop_exit
      _
    %313 = vsyncpa [#allocation3], 1
    %s314 = scalar_lea.sflag [#allocation3], 1
    %315 = vsyncpa %s314, 1
    %316 = vsyncpa [#allocation4], 1
    %s317 = scalar_lea.sflag [#allocation4], 1
    %318 = vsyncpa %s317, 1
    %319 = vsyncpa [#allocation5], 1
    %s320 = scalar_lea.sflag [#allocation5], 1
    %321 = vsyncpa %s320, 1

</llo_original>
